<compile_context>
chip_gen: v7x
topology: tpu7x:2x2x1
jax: 0.10.0
libtpu: 0.0.40
codegen_flags: <defaults>
</compile_context>

<pallas_src>
import jax
import jax.numpy as jnp
from jax.experimental import pallas as pl
from jax.experimental.pallas import tpu as pltpu


def _round_up(x, m):
    return (x + m - 1) // m * m


def _pick_divisor_tile(total, target):
    """Largest multiple of 128 <= min(target, total) that divides total."""
    cand = max((min(target, total) // 128) * 128, 128)
    while total % cand != 0:
        cand -= 128
    return cand


# ---------------------------------------------------------------------------
# Stage 1: H = d_col * (X @ W)   (bf16 MXU inputs, f32 accum + f32 scaling,
# bf16 output).  Folding d_col into H removes the per-A-tile normalization.
# ---------------------------------------------------------------------------
def _xw_kernel(x_ref, w_ref, d_ref, h_ref):
    h = jnp.dot(x_ref[...], w_ref[...], preferred_element_type=jnp.float32)
    h_ref[...] = (d_ref[...] * h).astype(h_ref.dtype)


# ---------------------------------------------------------------------------
# Stage 2: out = d_row * (A @ H) + b
# grid = (row_blocks, k_blocks); reduction axis last; the f32 output block
# itself is the accumulator (its block index is constant over k).
# A arrives as int8 and is cast to bf16 on the VPU right before the MXU.
# ---------------------------------------------------------------------------
def _agg_kernel(a_ref, h_ref, dr_ref, b_ref, o_ref):
    k = pl.program_id(1)
    tk = a_ref.shape[1]

    @pl.when(k == 0)
    def _():
        o_ref[...] = jnp.zeros_like(o_ref)

    a_tile = a_ref[...].astype(jnp.bfloat16)          # int8 -> bf16, 1 VPU op/elem
    if h_ref.shape[0] == tk:
        h_tile = h_ref[...]                           # H tiled per k step
    else:
        # H is VMEM-resident (full array, constant block index); slice it.
        h_tile = h_ref[pl.ds(pl.multiple_of(k * tk, 128), tk), :]
    o_ref[...] += jnp.dot(a_tile, h_tile, preferred_element_type=jnp.float32)

    @pl.when(k == pl.num_programs(1) - 1)
    def _():
        o_ref[...] = dr_ref[...] * o_ref[...] + b_ref[...]


# ---------------------------------------------------------------------------
# Graph operands: (A + I) as int8 (values 0/1/2, exact) + D^{-1/2} in f32.
# Duplicate edges collapse to weight 1 (matches the .set()-based reference).
# ---------------------------------------------------------------------------
def build_graph_operands(edge_index, num_nodes, n_pad):
    src, dst = edge_index[0], edge_index[1]
    a = jnp.zeros((n_pad, n_pad), jnp.int8)
    a = a.at[dst, src].set(jnp.int8(1))               # messages flow src -> dst
    diag = jnp.arange(num_nodes)
    a = a.at[diag, diag].add(jnp.int8(1))             # A + I (real nodes only)
    deg = jnp.sum(a, axis=1, dtype=jnp.int32).astype(jnp.float32)
    d_inv_sqrt = jnp.where(deg > 0.0, jax.lax.rsqrt(deg), 0.0)
    return a, d_inv_sqrt


def gcn_forward_pallas(x, edge_index, weight, bias, *,
                       tm_target=512, tk_target=2048,
                       vmem_budget=48 * 1024 * 1024):
    """Forward of the wrapped GCN layer: D^-1/2 (A+I) D^-1/2 (x @ W) + b."""
    n, f_in = x.shape
    f_out = weight.shape[1]

    n_pad = _round_up(n, 128)
    fi_pad = _round_up(f_in, 128)
    fo_pad = _round_up(f_out, 128)

    # bf16 operands for stage 1 (native MXU rate; H is stored bf16 anyway).
    x_p = jnp.zeros((n_pad, fi_pad), jnp.bfloat16).at[:n, :f_in].set(
        x.astype(jnp.bfloat16))
    w_p = jnp.zeros((fi_pad, fo_pad), jnp.bfloat16).at[:f_in, :f_out].set(
        weight.astype(jnp.bfloat16))
    b_p = jnp.zeros((1, fo_pad), jnp.float32).at[0, :f_out].set(bias)

    a_i8, d_inv_sqrt = build_graph_operands(edge_index, n, n_pad)
    d_col = d_inv_sqrt.reshape(n_pad, 1)   # folded into H rows (stage 1)
    d_row = d_inv_sqrt.reshape(n_pad, 1)   # applied to f32 acc (stage 2 epilogue)

    # ---- Stage-2 tile plan (big tiles, shrunk to a VMEM budget that is safe
    # on v5e/v6e/v7x; megacore still shards the row axis when n_pad/tm >= 2).
    tm = _pick_divisor_tile(n_pad, tm_target)
    tk = _pick_divisor_tile(n_pad, tk_target)
    h_bytes = n_pad * fo_pad * 2
    h_resident = h_bytes <= vmem_budget // 3

    def _footprint(tm_, tk_):
        a_bytes = 2 * tm_ * tk_                              # int8 A, double-buffered
        hb = h_bytes if h_resident else 2 * tk_ * fo_pad * 2
        o_bytes = 2 * tm_ * fo_pad * 4
        return a_bytes + hb + o_bytes + (1 << 20)            # + headroom

    while _footprint(tm, tk) > vmem_budget and tk > 128:
        tk = _pick_divisor_tile(n_pad, tk - 128)
    while _footprint(tm, tk) > vmem_budget and tm > 128:
        tm = _pick_divisor_tile(n_pad, tm - 128)

    vmem_limit = int(min(max(2 * _footprint(tm, tk), 32 << 20), 48 << 20))

    # ---- Stage 1: H = d_col * (X @ W), computed once.
    # TODO(synk): for very large fo_pad (multi-thousand) add an fo grid axis so
    # the bf16 W block stays under the v7x VMEM budget.
    tm1 = _pick_divisor_tile(n_pad, 512)
    h = pl.pallas_call(
        _xw_kernel,
        out_shape=jax.ShapeDtypeStruct((n_pad, fo_pad), jnp.bfloat16),
        grid=(n_pad // tm1,),
        in_specs=[
            pl.BlockSpec((tm1, fi_pad), lambda i: (i, 0)),
            pl.BlockSpec((fi_pad, fo_pad), lambda i: (0, 0)),   # W, fetched once
            pl.BlockSpec((tm1, 1), lambda i: (i, 0)),           # d_col rows
        ],
        out_specs=pl.BlockSpec((tm1, fo_pad), lambda i: (i, 0)),
        compiler_params=pltpu.CompilerParams(
            dimension_semantics=("parallel",),
            vmem_limit_bytes=vmem_limit),
    )(x_p, w_p, d_col)

    # ---- Stage 2: tiled aggregation.
    if h_resident:
        h_spec = pl.BlockSpec((n_pad, fo_pad), lambda i, k: (0, 0))  # resident
    else:
        h_spec = pl.BlockSpec((tk, fo_pad), lambda i, k: (k, 0))     # streamed

    out_p = pl.pallas_call(
        _agg_kernel,
        out_shape=jax.ShapeDtypeStruct((n_pad, fo_pad), jnp.float32),
        grid=(n_pad // tm, n_pad // tk),
        in_specs=[
            pl.BlockSpec((tm, tk), lambda i, k: (i, k)),       # A tile (int8)
            h_spec,                                            # H (bf16)
            pl.BlockSpec((tm, 1), lambda i, k: (i, 0)),        # d_row
            pl.BlockSpec((1, fo_pad), lambda i, k: (0, 0)),    # bias
        ],
        out_specs=pl.BlockSpec((tm, fo_pad), lambda i, k: (i, 0)),
        compiler_params=pltpu.CompilerParams(
            dimension_semantics=("parallel", "arbitrary"),
            vmem_limit_bytes=vmem_limit),
    )(a_i8, h, d_row, b_p)

    return out_p[:n, :f_out]


class WrapGNN:
    """JAX counterpart of WrapGNN: delegates to the wrapped layer's forward.

    wrap_forward / wrap_message are identity hooks, so forward == base forward.
    # TODO(synk): backup-layer deepcopy / state-dict recovery / message
    # re-binding is host-side serialization plumbing with no tensor-compute
    # equivalent; intentionally omitted.
    """

    def __init__(self, weight, bias):
        self.weight = weight
        self.bias = bias
        self.last_custom_kwargs = None

    def wrap_forward(self, x, edge_index, *args, **kwargs):
        pass  # no-op hook, exactly as in the PyTorch module

    def wrap_message(self, index, **kwargs):
        return kwargs  # identity hook

    def __call__(self, x, edge_index, **kwargs):
        # The wrapped GCN layer takes only (x, edge_index), so every kwarg is
        # a "custom" kwarg (pure Python bookkeeping, as in the original).
        self.last_custom_kwargs = dict(kwargs)
        self.wrap_forward(x, edge_index, **kwargs)
        out = gcn_forward_pallas(x, edge_index, self.weight, self.bias)
        self.last_custom_kwargs = None
        return out


if __name__ == "__main__":
    key = jax.random.PRNGKey(0)
    k_x, k_e, k_w = jax.random.split(key, 3)

    num_nodes, f_in, f_out, num_edges = 16, 8, 32, 40

    x = jax.random.normal(k_x, (num_nodes, f_in), dtype=jnp.float32)
    edge_index = jax.random.randint(
        k_e, (2, num_edges), 0, num_nodes, dtype=jnp.int32)

    # Deterministic Glorot-uniform-style init for the wrapped GCN layer.
    limit = (6.0 / (f_in + f_out)) ** 0.5
    weight = jax.random.uniform(
        k_w, (f_in, f_out), jnp.float32, minval=-limit, maxval=limit)
    bias = jnp.zeros((f_out,), jnp.float32)

    model = WrapGNN(weight, bias)
    out = model(x, edge_index, some_custom_flag=True)
    out = jax.block_until_ready(out)

    # Reference in plain f32 JAX (kernel uses bf16 matmuls -> loose tolerance).
    src, dst = edge_index[0], edge_index[1]
    a_ref = jnp.zeros((num_nodes, num_nodes), jnp.float32).at[dst, src].set(1.0)
    a_ref = a_ref + jnp.eye(num_nodes, dtype=jnp.float32)
    deg = jnp.sum(a_ref, axis=1)
    d = jnp.where(deg > 0, 1.0 / jnp.sqrt(deg), 0.0)
    a_hat = d[:, None] * a_ref * d[None, :]
    ref = a_hat @ (x @ weight) + bias[None, :]

    assert out.shape == (num_nodes, f_out)
    assert jnp.allclose(out, ref, atol=5e-2, rtol=5e-2), (
        float(jnp.max(jnp.abs(out - ref))))

    print("KERNEL_OK")
</pallas_src>

<mosaic_0001>
module attributes {stable_mosaic.version = 11 : i64} {
  func.func @_xw_kernel(%arg0: i32, %arg1: memref<128x128xbf16, #tpu.memory_space<vmem>>, %arg2: memref<128x128xbf16, #tpu.memory_space<vmem>>, %arg3: memref<128x1xf32, #tpu.memory_space<vmem>>, %arg4: memref<128x128xbf16, #tpu.memory_space<vmem>>) attributes {dimension_semantics = [#tpu.dimension_semantics<parallel>], iteration_bounds = array<i64: 1>, scalar_prefetch = 0 : i64, scratch_operands = 0 : i64, tpu.core_type = #tpu.core_type<tc>, window_params = [{transform_indices = @transform_0, window_bounds = array<i64: 128, 128>}, {pipeline_mode = #tpu.pipeline_mode<synchronous>, transform_indices = @transform_1, window_bounds = array<i64: 128, 128>}, {transform_indices = @transform_2, window_bounds = array<i64: 128, 1>}, {transform_indices = @transform_3, window_bounds = array<i64: 128, 128>}]} {
    %c0 = arith.constant 0 : index
    %c0_0 = arith.constant 0 : index
    %0 = vector.load %arg1[%c0, %c0_0] : memref<128x128xbf16, #tpu.memory_space<vmem>>, vector<128x128xbf16>
    %c0_1 = arith.constant 0 : index
    %c0_2 = arith.constant 0 : index
    %1 = vector.load %arg2[%c0_1, %c0_2] : memref<128x128xbf16, #tpu.memory_space<vmem>>, vector<128x128xbf16>
    %cst = arith.constant dense<0.000000e+00> : vector<128x128xf32>
    %2 = tpu.matmul %0, %1, %cst {dimension_numbers = #tpu.dot_dimension_numbers<[1], [0], [0], [1], [0, 0, 1, 1], [], []>} : vector<128x128xbf16>, vector<128x128xbf16>, vector<128x128xf32> -> vector<128x128xf32>
    %c0_3 = arith.constant 0 : index
    %c0_4 = arith.constant 0 : index
    %3 = vector.load %arg3[%c0_3, %c0_4] : memref<128x1xf32, #tpu.memory_space<vmem>>, vector<128x1xf32>
    %4 = vector.broadcast %3 : vector<128x1xf32> to vector<128x128xf32>
    %5 = arith.mulf %4, %2 : vector<128x128xf32>
    %6 = arith.truncf %5 : vector<128x128xf32> to vector<128x128xbf16>
    %c0_5 = arith.constant 0 : index
    %c0_6 = arith.constant 0 : index
    %7 = vector.load %arg4[%c0_5, %c0_6] : memref<128x128xbf16, #tpu.memory_space<vmem>>, vector<128x128xbf16>
    tpu.vector_store %arg4[%c0_5, %c0_6], %6 {strides = array<i32>} : memref<128x128xbf16, #tpu.memory_space<vmem>>, vector<128x128xbf16>,
    return
  }
  func.func @transform_0(%arg0: i32) -> (i32, i32) {
    %c0_i32 = arith.constant 0 : i32
    %c0_i32_0 = arith.constant 0 : i32
    return %arg0, %c0_i32 : i32, i32
  }
  func.func @transform_1(%arg0: i32) -> (i32, i32) {
    %c0_i32 = arith.constant 0 : i32
    %c0_i32_0 = arith.constant 0 : i32
    %c0_i32_1 = arith.constant 0 : i32
    return %c0_i32, %c0_i32_0 : i32, i32
  }
  func.func @transform_2(%arg0: i32) -> (i32, i32) {
    %c0_i32 = arith.constant 0 : i32
    %c0_i32_0 = arith.constant 0 : i32
    return %arg0, %c0_i32 : i32, i32
  }
  func.func @transform_3(%arg0: i32) -> (i32, i32) {
    %c0_i32 = arith.constant 0 : i32
    %c0_i32_0 = arith.constant 0 : i32
    return %arg0, %c0_i32 : i32, i32
  }
}

</mosaic_0001>

<llo_original>
// kernel: tpu_custom_call.1
$region0: #{tpu_custom_call.1}
  #allocation0 [shape = 'u32[]', space=smem, size = 0x4, offset = 0x4, fixed_abs, tag = 'smem constant byte address 0x4 - core index']
  #allocation1 [shape = 'u32[144,128]{1,0:T(1,128)}', space=vmem, size = 0x12000, scoped, tag = 'internal scratch']
  %s0 = inlined_call_operand.vmem [shape: bf16[128,128], index: 0, kind: input, shape index: {}]
  %s1 = inlined_call_operand.vmem [shape: bf16[128,128], index: 1, kind: input, shape index: {}]
  %s2 = inlined_call_operand.vmem [shape: f32[128,1], index: 2, kind: input, shape index: {}]
  %s3 = inlined_call_operand.hbm [shape: bf16[128,128], index: 3, kind: output, shape index: {}]
  %s4 = sld [smem:[#allocation0]]
  $region22: #{tpu_custom_call.1} parent=0
    _
  %s6 = ssub.s32 1, %s4
  %s7 = scalar_select 0, %s6, %s4
  $region1: #{tpu_custom_call.1} parent=0
    #allocation2 [shape = 'u8[32768]{0}', space=vmem, size = 0x8000, scoped, tag = 'output window, operand 0, single buffered']
    #allocation3 [shape = 's32[1]{0}', space=sflag, size = 0x4, scoped, tag = 'scoped memory for tpu_custom_call.1']
    %8 = vsyncpa [#allocation3], 0
    // Predicated region
    $region2: #{tpu_custom_call.1} parent=1 // pred_check
      _
    $region3: #{tpu_custom_call.1} parent=1 // pred_check_branch
      %10 = sbr.rel (0) target = $region5
    $region4: #{tpu_custom_call.1} parent=1 // pred_region
      _
    $region5: #{tpu_custom_call.1} parent=1 // pred_fallthru
      _
    // Predicated region
    $region6: #{tpu_custom_call.1} parent=1 // pred_check
      _
    $region7: #{tpu_custom_call.1} parent=1 // pred_check_branch
      %12 = sbr.rel (0) target = $region9
    $region8: #{tpu_custom_call.1} parent=1 // pred_region
      _
    $region9: #{tpu_custom_call.1} parent=1 // pred_fallthru
      _
    // Predicated region
    $region10: #{tpu_custom_call.1} parent=1 // pred_check
      _
    $region11: #{tpu_custom_call.1} parent=1 // pred_check_branch
      %14 = sbr.rel (0) target = $region13
    $region12: #{tpu_custom_call.1} parent=1 // pred_region
      _
    $region13: #{tpu_custom_call.1} parent=1 // pred_fallthru
      _
    %v16 = vld [vmem:[%s0] sm:$0xf]
    %v17 = vld [vmem:[%s0 + $0x4] sm:$0xf]
    %v18 = vld [vmem:[%s0 + $0x8] sm:$0xf]
    %v19 = vld [vmem:[%s0 + $0xc] sm:$0xf]
    %v20 = vld [vmem:[%s0 + $0x10] sm:$0xf]
    %v21 = vld [vmem:[%s0 + $0x14] sm:$0xf]
    %v22 = vld [vmem:[%s0 + $0x18] sm:$0xf]
    %v23 = vld [vmem:[%s0 + $0x1c] sm:$0xf]
    %v24 = vld [vmem:[%s0 + $0x20] sm:$0xf]
    %v25 = vld [vmem:[%s0 + $0x24] sm:$0xf]
    %v26 = vld [vmem:[%s0 + $0x28] sm:$0xf]
    %v27 = vld [vmem:[%s0 + $0x2c] sm:$0xf]
    %v28 = vld [vmem:[%s0 + $0x30] sm:$0xf]
    %v29 = vld [vmem:[%s0 + $0x34] sm:$0xf]
    %v30 = vld [vmem:[%s0 + $0x38] sm:$0xf]
    %v31 = vld [vmem:[%s0 + $0x3c] sm:$0xf]
    %v32 = vld [vmem:[%s1] sm:$0xf]
    %v33 = vld [vmem:[%s1 + $0x4] sm:$0xf]
    %v34 = vld [vmem:[%s1 + $0x8] sm:$0xf]
    %v35 = vld [vmem:[%s1 + $0xc] sm:$0xf]
    %v36 = vld [vmem:[%s1 + $0x10] sm:$0xf]
    %v37 = vld [vmem:[%s1 + $0x14] sm:$0xf]
    %v38 = vld [vmem:[%s1 + $0x18] sm:$0xf]
    %v39 = vld [vmem:[%s1 + $0x1c] sm:$0xf]
    %v40 = vld [vmem:[%s1 + $0x20] sm:$0xf]
    %v41 = vld [vmem:[%s1 + $0x24] sm:$0xf]
    %v42 = vld [vmem:[%s1 + $0x28] sm:$0xf]
    %v43 = vld [vmem:[%s1 + $0x2c] sm:$0xf]
    %v44 = vld [vmem:[%s1 + $0x30] sm:$0xf]
    %v45 = vld [vmem:[%s1 + $0x34] sm:$0xf]
    %v46 = vld [vmem:[%s1 + $0x38] sm:$0xf]
    %v47 = vld [vmem:[%s1 + $0x3c] sm:$0xf]
    %v64 = vunpack.c.l.b16 %v16
    %v65 = vunpack.c.l.b16 %v17
    %v66 = vunpack.c.l.b16 %v18
    %v67 = vunpack.c.l.b16 %v19
    %v68 = vunpack.c.l.b16 %v20
    %v69 = vunpack.c.l.b16 %v21
    %v70 = vunpack.c.l.b16 %v22
    %v71 = vunpack.c.l.b16 %v23
    %v72 = vunpack.c.l.b16 %v24
    %v73 = vunpack.c.l.b16 %v25
    %v74 = vunpack.c.l.b16 %v26
    %v75 = vunpack.c.l.b16 %v27
    %v76 = vunpack.c.l.b16 %v28
    %v77 = vunpack.c.l.b16 %v29
    %v78 = vunpack.c.l.b16 %v30
    %v79 = vunpack.c.l.b16 %v31
    %v80 = vpack.c.b16 %v65, %v64
    %v81 = vpack.c.b16 %v67, %v66
    %v82 = vpack.c.b16 %v69, %v68
    %v83 = vpack.c.b16 %v71, %v70
    %v84 = vpack.c.b16 %v73, %v72
    %v85 = vpack.c.b16 %v75, %v74
    %v86 = vpack.c.b16 %v77, %v76
    %v87 = vpack.c.b16 %v79, %v78
    %v112 = vunpack.c.l.b16 %v32
    %v113 = vunpack.c.l.b16 %v33
    %v114 = vunpack.c.l.b16 %v34
    %v115 = vunpack.c.l.b16 %v35
    %v116 = vunpack.c.l.b16 %v36
    %v117 = vunpack.c.l.b16 %v37
    %v118 = vunpack.c.l.b16 %v38
    %v119 = vunpack.c.l.b16 %v39
    %v120 = vunpack.c.l.b16 %v40
    %v121 = vunpack.c.l.b16 %v41
    %v122 = vunpack.c.l.b16 %v42
    %v123 = vunpack.c.l.b16 %v43
    %v124 = vunpack.c.l.b16 %v44
    %v125 = vunpack.c.l.b16 %v45
    %v126 = vunpack.c.l.b16 %v46
    %v127 = vunpack.c.l.b16 %v47
    %v128 = vpack.c.b16 %v113, %v112
    %v129 = vpack.c.b16 %v115, %v114
    %v130 = vpack.c.b16 %v117, %v116
    %v131 = vpack.c.b16 %v119, %v118
    %v132 = vpack.c.b16 %v121, %v120
    %v133 = vpack.c.b16 %v123, %v122
    %v134 = vpack.c.b16 %v125, %v124
    %v135 = vpack.c.b16 %v127, %v126
    %144 = vmatprep.subr.bf16.mxu0 0
    %145 = vmatpush1.bf16.msra.mxu0 %v128
    %146 = vmatprep.subr.bf16.mxu0 0
    %147 = vmatpush1.bf16.msra.mxu0 %v129
    %148 = vmatprep.subr.bf16.mxu0 0
    %149 = vmatpush1.bf16.msra.mxu0 %v130
    %150 = vmatprep.subr.bf16.mxu0 0
    %151 = vmatpush1.bf16.msra.mxu0 %v131
    %152 = vmatprep.subr.bf16.mxu0 0
    %153 = vmatpush1.bf16.msra.mxu0 %v132
    %154 = vmatprep.subr.bf16.mxu0 0
    %155 = vmatpush1.bf16.msra.mxu0 %v133
    %156 = vmatprep.subr.bf16.mxu0 0
    %157 = vmatpush1.bf16.msra.mxu0 %v134
    %158 = vmatprep.subr.bf16.mxu0 0
    %159 = vmatpush1.bf16.msra.mxu0 %v135
    %160 = vmatprep.subr.bf16.mxu0 0
    %161 = vmatpush1.bf16.msra.mxu0 0
    %162 = vmatprep.subr.bf16.mxu0 0
    %163 = vmatpush1.bf16.msra.mxu0 0
    %164 = vmatprep.subr.bf16.mxu0 0
    %165 = vmatpush1.bf16.msra.mxu0 0
    %166 = vmatprep.subr.bf16.mxu0 0
    %167 = vmatpush1.bf16.msra.mxu0 0
    %168 = vmatprep.subr.bf16.mxu0 0
    %169 = vmatpush1.bf16.msra.mxu0 0
    %170 = vmatprep.subr.bf16.mxu0 0
    %171 = vmatpush1.bf16.msra.mxu0 0
    %172 = vmatprep.subr.bf16.mxu0 0
    %173 = vmatpush1.bf16.msra.mxu0 0
    %174 = vmatprep.subr.bf16.mxu0 0
    %175 = vmatpush1.bf16.msra.mxu0 0
    %176 = vmatprep.mubr.bf16.mxu0 0
    %177 = vmatmul.mubr.bf16.gmra.mrb[0].mxu0 %v80
    %v178 = vpop.f32.mrb[0].mxu0
    %v179 = vadd.f32 0.0, %v178
    %v180 = vpop.f32.mrb[0].mxu0
    %v181 = vpop.f32.mrb[0].mxu0
    %v182 = vadd.f32 0.0, %v181
    %v183 = vpop.f32.mrb[0].mxu0
    %184 = vmatprep.mubr.bf16.mxu0 0
    %185 = vmatmul.mubr.bf16.gmra.mrb[0].mxu0 %v81
    %v186 = vpop.f32.mrb[0].mxu0
    %v187 = vadd.f32 0.0, %v186
    %v188 = vpop.f32.mrb[0].mxu0
    %v189 = vpop.f32.mrb[0].mxu0
    %v190 = vadd.f32 0.0, %v189
    %v191 = vpop.f32.mrb[0].mxu0
    %192 = vmatprep.mubr.bf16.mxu0 0
    %193 = vmatmul.mubr.bf16.gmra.mrb[0].mxu0 %v82
    %v194 = vpop.f32.mrb[0].mxu0
    %v195 = vadd.f32 0.0, %v194
    %v196 = vpop.f32.mrb[0].mxu0
    %v197 = vpop.f32.mrb[0].mxu0
    %v198 = vadd.f32 0.0, %v197
    %v199 = vpop.f32.mrb[0].mxu0
    %200 = vmatprep.mubr.bf16.mxu0 0
    %201 = vmatmul.mubr.bf16.gmra.mrb[0].mxu0 %v83
    %v202 = vpop.f32.mrb[0].mxu0
    %v203 = vadd.f32 0.0, %v202
    %v204 = vpop.f32.mrb[0].mxu0
    %v205 = vpop.f32.mrb[0].mxu0
    %v206 = vadd.f32 0.0, %v205
    %v207 = vpop.f32.mrb[0].mxu0
    %208 = vmatprep.mubr.bf16.mxu0 0
    %209 = vmatmul.mubr.bf16.gmra.mrb[0].mxu0 %v84
    %v210 = vpop.f32.mrb[0].mxu0
    %v211 = vadd.f32 0.0, %v210
    %v212 = vpop.f32.mrb[0].mxu0
    %v213 = vpop.f32.mrb[0].mxu0
    %v214 = vadd.f32 0.0, %v213
    %v215 = vpop.f32.mrb[0].mxu0
    %216 = vmatprep.mubr.bf16.mxu0 0
    %217 = vmatmul.mubr.bf16.gmra.mrb[0].mxu0 %v85
    %v218 = vpop.f32.mrb[0].mxu0
    %v219 = vadd.f32 0.0, %v218
    %v220 = vpop.f32.mrb[0].mxu0
    %v221 = vpop.f32.mrb[0].mxu0
    %v222 = vadd.f32 0.0, %v221
    %v223 = vpop.f32.mrb[0].mxu0
    %224 = vmatprep.mubr.bf16.mxu0 0
    %225 = vmatmul.mubr.bf16.gmra.mrb[0].mxu0 %v86
    %v226 = vpop.f32.mrb[0].mxu0
    %v227 = vadd.f32 0.0, %v226
    %v228 = vpop.f32.mrb[0].mxu0
    %v229 = vpop.f32.mrb[0].mxu0
    %v230 = vadd.f32 0.0, %v229
    %v231 = vpop.f32.mrb[0].mxu0
    %232 = vmatprep.mubr.bf16.mxu0 0
    %233 = vmatmul.mubr.bf16.gmra.mrb[0].mxu0 %v87
    %v234 = vpop.f32.mrb[0].mxu0
    %v235 = vadd.f32 0.0, %v234
    %v236 = vpop.f32.mrb[0].mxu0
    %v237 = vpop.f32.mrb[0].mxu0
    %v238 = vadd.f32 0.0, %v237
    %v239 = vpop.f32.mrb[0].mxu0
    %240 = vdwg.mxu0
    %v241 = vld [vmem:[%s2] sm:$0xff]
    %v242 = vld [vmem:[%s2 + $0x8] sm:$0xff]
    %v243 = vld [vmem:[%s2 + $0x10] sm:$0xff]
    %v244 = vld [vmem:[%s2 + $0x18] sm:$0xff]
    %v245 = vld [vmem:[%s2 + $0x20] sm:$0xff]
    %v246 = vld [vmem:[%s2 + $0x28] sm:$0xff]
    %v247 = vld [vmem:[%s2 + $0x30] sm:$0xff]
    %v248 = vld [vmem:[%s2 + $0x38] sm:$0xff]
    %v249 = vld [vmem:[%s2 + $0x40] sm:$0xff]
    %v250 = vld [vmem:[%s2 + $0x48] sm:$0xff]
    %v251 = vld [vmem:[%s2 + $0x50] sm:$0xff]
    %v252 = vld [vmem:[%s2 + $0x58] sm:$0xff]
    %v253 = vld [vmem:[%s2 + $0x60] sm:$0xff]
    %v254 = vld [vmem:[%s2 + $0x68] sm:$0xff]
    %v255 = vld [vmem:[%s2 + $0x70] sm:$0xff]
    %v256 = vld [vmem:[%s2 + $0x78] sm:$0xff]
    %258 = vset.pattern.permute.xlu0 0
    %259 = vperm.xlu0 %258, %v241
    %v260 = vpop.permute.xlu0 %259
    %263 = vset.pattern.permute.xlu0 0
    %264 = vperm.xlu0 %263, %v242
    %v265 = vpop.permute.xlu0 %264
    %268 = vset.pattern.permute.xlu0 0
    %269 = vperm.xlu0 %268, %v243
    %v270 = vpop.permute.xlu0 %269
    %273 = vset.pattern.permute.xlu0 0
    %274 = vperm.xlu0 %273, %v244
    %v275 = vpop.permute.xlu0 %274
    %278 = vset.pattern.permute.xlu0 0
    %279 = vperm.xlu0 %278, %v245
    %v280 = vpop.permute.xlu0 %279
    %283 = vset.pattern.permute.xlu0 0
    %284 = vperm.xlu0 %283, %v246
    %v285 = vpop.permute.xlu0 %284
    %288 = vset.pattern.permute.xlu0 0
    %289 = vperm.xlu0 %288, %v247
    %v290 = vpop.permute.xlu0 %289
    %293 = vset.pattern.permute.xlu0 0
    %294 = vperm.xlu0 %293, %v248
    %v295 = vpop.permute.xlu0 %294
    %298 = vset.pattern.permute.xlu0 0
    %299 = vperm.xlu0 %298, %v249
    %v300 = vpop.permute.xlu0 %299
    %303 = vset.pattern.permute.xlu0 0
    %304 = vperm.xlu0 %303, %v250
    %v305 = vpop.permute.xlu0 %304
    %308 = vset.pattern.permute.xlu0 0
    %309 = vperm.xlu0 %308, %v251
    %v310 = vpop.permute.xlu0 %309
    %313 = vset.pattern.permute.xlu0 0
    %314 = vperm.xlu0 %313, %v252
    %v315 = vpop.permute.xlu0 %314
    %318 = vset.pattern.permute.xlu0 0
    %319 = vperm.xlu0 %318, %v253
    %v320 = vpop.permute.xlu0 %319
    %323 = vset.pattern.permute.xlu0 0
    %324 = vperm.xlu0 %323, %v254
    %v325 = vpop.permute.xlu0 %324
    %328 = vset.pattern.permute.xlu0 0
    %329 = vperm.xlu0 %328, %v255
    %v330 = vpop.permute.xlu0 %329
    %333 = vset.pattern.permute.xlu0 0
    %334 = vperm.xlu0 %333, %v256
    %v335 = vpop.permute.xlu0 %334
    %v337 = vmul.f32 %v260, %v179
    %v338 = vmul.f32 %v265, %v182
    %v339 = vmul.f32 %v270, %v187
    %v340 = vmul.f32 %v275, %v190
    %v341 = vmul.f32 %v280, %v195
    %v342 = vmul.f32 %v285, %v198
    %v343 = vmul.f32 %v290, %v203
    %v344 = vmul.f32 %v295, %v206
    %v345 = vmul.f32 %v300, %v211
    %v346 = vmul.f32 %v305, %v214
    %v347 = vmul.f32 %v310, %v219
    %v348 = vmul.f32 %v315, %v222
    %v349 = vmul.f32 %v320, %v227
    %v350 = vmul.f32 %v325, %v230
    %v351 = vmul.f32 %v330, %v235
    %v352 = vmul.f32 %v335, %v238
    %v353 = vpack.c.bf16 %v338, %v337
    %v354 = vpack.c.bf16 %v340, %v339
    %v355 = vpack.c.bf16 %v342, %v341
    %v356 = vpack.c.bf16 %v344, %v343
    %v357 = vpack.c.bf16 %v346, %v345
    %v358 = vpack.c.bf16 %v348, %v347
    %v359 = vpack.c.bf16 %v350, %v349
    %v360 = vpack.c.bf16 %v352, %v351
    %v369 = vunpack.c.l.b16 %v353
    %v370 = vunpack.c.h.b16 %v353
    %v371 = vunpack.c.l.b16 %v354
    %v372 = vunpack.c.h.b16 %v354
    %v373 = vunpack.c.l.b16 %v355
    %v374 = vunpack.c.h.b16 %v355
    %v375 = vunpack.c.l.b16 %v356
    %v376 = vunpack.c.h.b16 %v356
    %v377 = vunpack.c.l.b16 %v357
    %v378 = vunpack.c.h.b16 %v357
    %v379 = vunpack.c.l.b16 %v358
    %v380 = vunpack.c.h.b16 %v358
    %v381 = vunpack.c.l.b16 %v359
    %v382 = vunpack.c.h.b16 %v359
    %v383 = vunpack.c.l.b16 %v360
    %v384 = vunpack.c.h.b16 %v360
    %v385 = vpack.c.b16 %v369, %v369
    %v386 = vpack.c.b16 %v370, %v370
    %v387 = vpack.c.b16 %v371, %v371
    %v388 = vpack.c.b16 %v372, %v372
    %v389 = vpack.c.b16 %v373, %v373
    %v390 = vpack.c.b16 %v374, %v374
    %v391 = vpack.c.b16 %v375, %v375
    %v392 = vpack.c.b16 %v376, %v376
    %v393 = vpack.c.b16 %v377, %v377
    %v394 = vpack.c.b16 %v378, %v378
    %v395 = vpack.c.b16 %v379, %v379
    %v396 = vpack.c.b16 %v380, %v380
    %v397 = vpack.c.b16 %v381, %v381
    %v398 = vpack.c.b16 %v382, %v382
    %v399 = vpack.c.b16 %v383, %v383
    %v400 = vpack.c.b16 %v384, %v384
    %417 = vst [vmem:[#allocation2] sm:$0xf] %v385
    %418 = vst [vmem:[#allocation2 + $0x4] sm:$0xf] %v386
    %419 = vst [vmem:[#allocation2 + $0x8] sm:$0xf] %v387
    %420 = vst [vmem:[#allocation2 + $0xc] sm:$0xf] %v388
    %421 = vst [vmem:[#allocation2 + $0x10] sm:$0xf] %v389
    %422 = vst [vmem:[#allocation2 + $0x14] sm:$0xf] %v390
    %423 = vst [vmem:[#allocation2 + $0x18] sm:$0xf] %v391
    %424 = vst [vmem:[#allocation2 + $0x1c] sm:$0xf] %v392
    %425 = vst [vmem:[#allocation2 + $0x20] sm:$0xf] %v393
    %426 = vst [vmem:[#allocation2 + $0x24] sm:$0xf] %v394
    %427 = vst [vmem:[#allocation2 + $0x28] sm:$0xf] %v395
    %428 = vst [vmem:[#allocation2 + $0x2c] sm:$0xf] %v396
    %429 = vst [vmem:[#allocation2 + $0x30] sm:$0xf] %v397
    %430 = vst [vmem:[#allocation2 + $0x34] sm:$0xf] %v398
    %431 = vst [vmem:[#allocation2 + $0x38] sm:$0xf] %v399
    %432 = vst [vmem:[#allocation2 + $0x3c] sm:$0xf] %v400
    // Predicated region
    $region14: #{tpu_custom_call.1} parent=1 // pred_check
      _
    $region15: #{tpu_custom_call.1} parent=1 // pred_check_branch
      %434 = sbr.rel (0) target = $region17
    $region16: #{tpu_custom_call.1} parent=1 // pred_region
      %s436 = ssub.s32 1024, 1024
      %437 = vsyncadd [#allocation3], %s436
      %s438 = sshll.u32 [#allocation2], 4
      %s439 = int_to_ptr.vmem [resolvable:$true] %s438
      %444 = dma.vmem_to_hbm [thread:$0]  %s439, 1024, %s3, [#allocation3], 64, 64, 4
    $region17: #{tpu_custom_call.1} parent=1 // pred_fallthru
      _
    // Predicated region
    $region18: #{tpu_custom_call.1} parent=1 // pred_check
      _
    $region19: #{tpu_custom_call.1} parent=1 // pred_check_branch
      %446 = sbr.rel (0) target = $region21
    $region20: #{tpu_custom_call.1} parent=1 // pred_region
      %447 = dma.done [#allocation3], 1024
    $region21: #{tpu_custom_call.1} parent=1 // pred_fallthru
      _
    %448 = vsyncpa [#allocation3], 1

</llo_original>
